<compile_context>
chip_gen: v5e
topology: v5e:2x2
jax: 0.10.0
libtpu: 0.0.40
codegen_flags: <defaults>
</compile_context>

<pallas_src>
import functools

import jax
import jax.numpy as jnp
from jax import lax
from jax.experimental import pallas as pl
from jax.experimental.pallas import tpu as pltpu

LANE = 128          # vreg lane width (last dim)
SUBLANE = 8         # f32 sublanes (second-to-last dim)
GATE_ALIGN = 256    # pad hidden/vocab so MXU N-tiles (256-wide on v6e/v7x) are full


def _round_up(x, m):
    return ((x + m - 1) // m) * m


def _pick_tile(dim, candidates):
    for c in candidates:
        if c <= dim and dim % c == 0:
            return c
    return dim


def _tpu_vmem_bytes():
    """Physical VMEM per core; fall back to the v7x floor so sizing is safe everywhere."""
    try:
        return int(pltpu.get_tpu_info().vmem_capacity_bytes)
    except Exception:
        return 64 * 1024 * 1024


# ----------------------------------------------------------------------------
# Pallas kernels
# ----------------------------------------------------------------------------
def _matmul_bias_kernel(x_ref, w_ref, b_ref, o_ref):
    """o = x @ w + b  (w pre-transposed in the wrapper; f32 accumulation on the MXU)."""
    acc = jnp.dot(x_ref[...].astype(w_ref.dtype), w_ref[...],
                  preferred_element_type=jnp.float32)
    o_ref[...] = (acc + b_ref[...].astype(jnp.float32)).astype(o_ref.dtype)


def _gru_recurrence_kernel(gi_ref, w_hh_t_ref, b_hh_ref, out_ref, h_scr, *,
                           hidden, seq_total, chunk, emit_sequence, unroll,
                           has_tail):
    """Serial GRU recurrence over one (batch_block, seq_chunk) tile.

    gi (input-path gates + b_ih) is precomputed; only the h-path matmul and the gate
    nonlinearities run per step.  PyTorch gate order (r, z, n).  The hidden state is
    carried across seq chunks in the VMEM scratch `h_scr`.
    """
    s = pl.program_id(1)

    @pl.when(s == 0)
    def _():
        h_scr[...] = jnp.zeros_like(h_scr)

    H = hidden
    bb = h_scr.shape[0]
    three_h = 3 * H
    # Hoisted out of the loop: broadcast is not CSE'd by JAX, so do it once per chunk.
    b_hh = jnp.broadcast_to(b_hh_ref[...].astype(jnp.float32), (bb, three_h))
    base = s * chunk

    def step(t, h):
        gi_t = gi_ref[t].astype(jnp.float32)                        # (bb, 3H)
        gh = jnp.dot(h.astype(w_hh_t_ref.dtype), w_hh_t_ref[...],
                     preferred_element_type=jnp.float32) + b_hh
        r = jax.nn.sigmoid(gi_t[:, 0:H] + gh[:, 0:H])
        z = jax.nn.sigmoid(gi_t[:, H:2 * H] + gh[:, H:2 * H])
        n = jnp.tanh(gi_t[:, 2 * H:3 * H] + r * gh[:, 2 * H:3 * H])
        h_new = (1.0 - z) * n + z * h
        if has_tail:
            # seq was padded up to a multiple of `chunk`; discard the padded steps.
            h_new = jnp.where(base + t < seq_total, h_new, h)
        if emit_sequence:
            out_ref[t] = h_new.astype(out_ref.dtype)
        return h_new

    h_final = lax.fori_loop(0, chunk, step, h_scr[...], unroll=unroll)
    h_scr[...] = h_final

    if not emit_sequence:
        @pl.when(s == pl.num_programs(1) - 1)
        def _():
            out_ref[...] = h_final.astype(out_ref.dtype)


# ----------------------------------------------------------------------------
# pallas_call wrappers
# ----------------------------------------------------------------------------
def _input_gates(x2d, w_ih_t, b_ih, *, out_dtype, vmem_limit):
    """gi = X @ W_ih^T + b_ih for all timesteps as one tiled MXU matmul (rows x 3H grid)."""
    rows, in_pad = x2d.shape
    three_h = w_ih_t.shape[1]
    tile_r = min(512, rows)                      # rows is always a multiple of 8
    rp = _round_up(rows, tile_r)
    if rp != rows:
        x2d = jnp.pad(x2d, ((0, rp - rows), (0, 0)))
    tile_n = _pick_tile(three_h, (1024, 768, 512, 384, 256, 128))
    wsize = jnp.dtype(w_ih_t.dtype).itemsize
    osize = jnp.dtype(out_dtype).itemsize
    gi = pl.pallas_call(
        _matmul_bias_kernel,
        out_shape=jax.ShapeDtypeStruct((rp, three_h), out_dtype),
        grid=(rp // tile_r, three_h // tile_n),
        in_specs=[
            pl.BlockSpec((tile_r, in_pad), lambda i, j: (i, 0)),
            pl.BlockSpec((in_pad, tile_n), lambda i, j: (0, j)),
            pl.BlockSpec((1, tile_n), lambda i, j: (0, j)),
        ],
        out_specs=pl.BlockSpec((tile_r, tile_n), lambda i, j: (i, j)),
        compiler_params=pltpu.CompilerParams(
            dimension_semantics=("parallel", "parallel"),
            vmem_limit_bytes=vmem_limit),
        cost_estimate=pl.CostEstimate(
            flops=2 * rp * in_pad * three_h,
            transcendentals=0,
            bytes_accessed=(rp * in_pad * wsize
                            + (rp // tile_r) * in_pad * three_h * wsize
                            + three_h * 4 + rp * three_h * osize)),
    )(x2d, w_ih_t, b_ih)
    return gi[:rows] if rp != rows else gi


def _recurrence_tiling(seq, Bp, Hp, dtype, *, max_chunk=None):
    """Choose (seq_chunk, num_batch_blocks, batch_block) from the physical VMEM budget."""
    phys = _tpu_vmem_bytes()
    budget = int(phys * 0.70)                    # headroom; ~45 MiB on v7x, ~90 MiB on v6e
    dsize = jnp.dtype(dtype).itemsize
    # Split batch across the two v7x TensorCores when there is enough of it.
    nb = 2 if (Bp >= 16 and Bp % 16 == 0) else 1
    bb = Bp // nb
    w_bytes = Hp * 3 * Hp * dsize + 3 * Hp * 8 + bb * Hp * 4
    per_step = 2 * bb * (3 * Hp * dsize + Hp * 4)     # double-buffered gi in + hidden out
    avail = budget - 2 * w_bytes
    chunk = 1 if avail <= per_step else max(1, min(seq, avail // per_step))
    if max_chunk is not None:
        chunk = max(1, min(chunk, int(max_chunk)))
    return int(chunk), nb, bb


def _gru_recurrence(gi, w_hh_t, b_hh, *, chunk, batch_block, seq_total,
                    emit_sequence, out_dtype, vmem_limit):
    seq_pad, Bp, three_h = gi.shape
    Hp = three_h // 3
    nb = Bp // batch_block
    ns = seq_pad // chunk
    unroll = 2 if Hp <= 512 else 1               # large Hp: avoid vreg spill from unrolling

    if emit_sequence:
        out_shape = jax.ShapeDtypeStruct((seq_pad, Bp, Hp), out_dtype)
        out_spec = pl.BlockSpec((chunk, batch_block, Hp), lambda b, s: (s, b, 0))
        out_bytes = seq_pad * Bp * Hp * jnp.dtype(out_dtype).itemsize
    else:
        out_shape = jax.ShapeDtypeStruct((Bp, Hp), jnp.float32)
        out_spec = pl.BlockSpec((batch_block, Hp), lambda b, s: (b, 0))
        out_bytes = Bp * Hp * 4

    kernel = functools.partial(
        _gru_recurrence_kernel, hidden=Hp, seq_total=seq_total, chunk=chunk,
        emit_sequence=emit_sequence, unroll=unroll,
        has_tail=(seq_total != seq_pad))
    gsize = jnp.dtype(gi.dtype).itemsize
    wsize = jnp.dtype(w_hh_t.dtype).itemsize
    return pl.pallas_call(
        kernel,
        out_shape=out_shape,
        grid=(nb, ns),
        in_specs=[
            pl.BlockSpec((chunk, batch_block, three_h), lambda b, s: (s, b, 0)),
            pl.BlockSpec((Hp, three_h), lambda b, s: (0, 0)),
            pl.BlockSpec((1, three_h), lambda b, s: (0, 0)),
        ],
        out_specs=out_spec,
        scratch_shapes=[pltpu.VMEM((batch_block, Hp), jnp.float32)],
        compiler_params=pltpu.CompilerParams(
            dimension_semantics=("parallel", "arbitrary"),
            vmem_limit_bytes=vmem_limit),
        cost_estimate=pl.CostEstimate(
            flops=2 * seq_pad * Bp * Hp * three_h + 10 * seq_pad * Bp * Hp,
            transcendentals=3 * seq_pad * Bp * Hp,
            bytes_accessed=(seq_pad * Bp * three_h * gsize
                            + Hp * three_h * wsize + three_h * 8 + out_bytes)),
    )(gi, w_hh_t, b_hh)


def _fc(h, fc_w_t, fc_b, *, vmem_limit):
    """Logits = h @ W_fc^T + b, tiled over (padded) vocab with lane-dense output tiles."""
    batch, hp = h.shape
    vp = fc_w_t.shape[1]
    tile_v = _pick_tile(vp, (2048, 1024, 512, 256, 128))
    wsize = jnp.dtype(fc_w_t.dtype).itemsize
    return pl.pallas_call(
        _matmul_bias_kernel,
        out_shape=jax.ShapeDtypeStruct((batch, vp), jnp.float32),
        grid=(vp // tile_v,),
        in_specs=[
            pl.BlockSpec((batch, hp), lambda j: (0, 0)),
            pl.BlockSpec((hp, tile_v), lambda j: (0, j)),
            pl.BlockSpec((1, tile_v), lambda j: (0, j)),
        ],
        out_specs=pl.BlockSpec((batch, tile_v), lambda j: (0, j)),
        compiler_params=pltpu.CompilerParams(
            dimension_semantics=("parallel",),
            vmem_limit_bytes=vmem_limit),
        cost_estimate=pl.CostEstimate(
            flops=2 * batch * hp * vp,
            transcendentals=0,
            bytes_accessed=batch * hp * 4 + hp * vp * wsize + vp * 4 + batch * vp * 4),
    )(h, fc_w_t, fc_b)


# ----------------------------------------------------------------------------
# One-time parameter preparation: transpose + pad to (8,128)/(256-gate)-friendly shapes.
# Each r/z/n gate occupies its own 256-aligned column block; padded hidden channels stay
# exactly zero through the recurrence because h starts at 0 and w_hh_t/b_hh are zero there.
# ----------------------------------------------------------------------------
def prepare_padded_params(params, *, vocab_size, embed_size, hidden_size,
                          num_layers, param_dtype=jnp.float32):
    Ep = _round_up(embed_size, LANE)
    Hp = _round_up(hidden_size, GATE_ALIGN)
    Vp = _round_up(vocab_size, GATE_ALIGN)
    H = hidden_size
    out = {"hidden_pad": Hp, "vocab_pad": Vp, "embed_pad": Ep}
    out["embedding"] = jnp.pad(
        params["embedding"], ((0, 0), (0, Ep - embed_size))).astype(param_dtype)
    for l in range(num_layers):
        in_dim = embed_size if l == 0 else hidden_size
        Ip = Ep if l == 0 else Hp
        w_ih_t = jnp.zeros((Ip, 3 * Hp), jnp.float32)
        w_hh_t = jnp.zeros((Hp, 3 * Hp), jnp.float32)
        b_ih = jnp.zeros((1, 3 * Hp), jnp.float32)
        b_hh = jnp.zeros((1, 3 * Hp), jnp.float32)
        for g in range(3):
            w_ih_t = w_ih_t.at[:in_dim, g * Hp:g * Hp + H].set(
                params[f"w_ih_l{l}"][g * H:(g + 1) * H, :].T)
            w_hh_t = w_hh_t.at[:H, g * Hp:g * Hp + H].set(
                params[f"w_hh_l{l}"][g * H:(g + 1) * H, :].T)
            b_ih = b_ih.at[0, g * Hp:g * Hp + H].set(
                params[f"b_ih_l{l}"][g * H:(g + 1) * H])
            b_hh = b_hh.at[0, g * Hp:g * Hp + H].set(
                params[f"b_hh_l{l}"][g * H:(g + 1) * H])
        out[f"w_ih_t_l{l}"] = w_ih_t.astype(param_dtype)
        out[f"w_hh_t_l{l}"] = w_hh_t.astype(param_dtype)
        out[f"b_ih_l{l}"] = b_ih          # biases stay f32 (added after f32 accumulation)
        out[f"b_hh_l{l}"] = b_hh
    fc_w_t = jnp.zeros((Hp, Vp), jnp.float32)
    fc_w_t = fc_w_t.at[:H, :vocab_size].set(params["fc_w"].T)
    out["fc_w_t"] = fc_w_t.astype(param_dtype)
    out["fc_b"] = jnp.zeros((1, Vp), jnp.float32).at[0, :vocab_size].set(params["fc_b"])
    return out


# ----------------------------------------------------------------------------
# Model forward (glue in plain JAX: embedding gather, layer loop, transposes)
# ----------------------------------------------------------------------------
def next_word_gru_forward(tokens, padded, *, num_layers, vocab_size, max_chunk=None):
    batch, seq = tokens.shape
    Bp = _round_up(batch, SUBLANE)
    Hp = padded["hidden_pad"]
    dtype = padded["embedding"].dtype
    vmem_limit = int(_tpu_vmem_bytes() * 0.85)

    chunk, _, bb = _recurrence_tiling(seq, Bp, Hp, dtype, max_chunk=max_chunk)
    seq_pad = _round_up(seq, chunk)

    tok = jnp.pad(tokens, ((0, Bp - batch), (0, 0)))
    # Embedding gather (wrapper glue), then time-major (seq, Bp, Ep) so the recurrence
    # slices one timestep off the leading axis of each chunk.
    x_tm = jnp.transpose(padded["embedding"][tok], (1, 0, 2))
    if seq_pad != seq:
        x_tm = jnp.pad(x_tm, ((0, seq_pad - seq), (0, 0), (0, 0)))

    h_last = None
    for l in range(num_layers):
        w_ih_t = padded[f"w_ih_t_l{l}"]
        in_pad = w_ih_t.shape[0]
        # Phase A: one big MXU matmul over the whole (padded) sequence (b_ih folded in).
        gi = _input_gates(x_tm.reshape(seq_pad * Bp, in_pad), w_ih_t,
                          padded[f"b_ih_l{l}"], out_dtype=dtype,
                          vmem_limit=vmem_limit).reshape(seq_pad, Bp, 3 * Hp)
        last = (l == num_layers - 1)
        # Phase B: pipelined serial recurrence; only the h-path matmul is on the
        # critical path, gi chunks stream through VMEM via BlockSpec double-buffering.
        out = _gru_recurrence(gi, padded[f"w_hh_t_l{l}"], padded[f"b_hh_l{l}"],
                              chunk=chunk, batch_block=bb, seq_total=seq,
                              emit_sequence=not last, out_dtype=dtype,
                              vmem_limit=vmem_limit)
        if last:
            h_last = out                 # (Bp, Hp) == gru_out[:, -1, :] (padded, f32)
        else:
            x_tm = out                   # (seq_pad, Bp, Hp)
    # dropout: identity at inference
    logits = _fc(h_last, padded["fc_w_t"], padded["fc_b"], vmem_limit=vmem_limit)
    return logits[:batch, :vocab_size]


# ----------------------------------------------------------------------------
# Pure-JAX reference (unpadded, f32, for correctness check)
# ----------------------------------------------------------------------------
def reference_forward(tokens, params, num_layers):
    emb = params["embedding"][tokens]
    batch, seq, _ = emb.shape
    x = emb
    for l in range(num_layers):
        H = params[f"w_hh_l{l}"].shape[1]
        h = jnp.zeros((batch, H), jnp.float32)
        outs = []
        for t in range(seq):
            gi = x[:, t, :] @ params[f"w_ih_l{l}"].T + params[f"b_ih_l{l}"]
            gh = h @ params[f"w_hh_l{l}"].T + params[f"b_hh_l{l}"]
            r = jax.nn.sigmoid(gi[:, 0:H] + gh[:, 0:H])
            z = jax.nn.sigmoid(gi[:, H:2 * H] + gh[:, H:2 * H])
            n = jnp.tanh(gi[:, 2 * H:3 * H] + r * gh[:, 2 * H:3 * H])
            h = (1.0 - z) * n + z * h
            outs.append(h)
        x = jnp.stack(outs, axis=1)
    h_last = x[:, -1, :]
    return h_last @ params["fc_w"].T + params["fc_b"]


# ----------------------------------------------------------------------------
def init_params(key, vocab_size, embed_size, hidden_size, num_layers):
    params = {}
    keys = jax.random.split(key, 2 + 4 * num_layers + 2)
    ki = iter(keys)
    params["embedding"] = jax.random.normal(next(ki), (vocab_size, embed_size),
                                            jnp.float32)
    k = 1.0 / jnp.sqrt(hidden_size)
    for l in range(num_layers):
        in_dim = embed_size if l == 0 else hidden_size
        params[f"w_ih_l{l}"] = jax.random.uniform(
            next(ki), (3 * hidden_size, in_dim), jnp.float32, -k, k)
        params[f"w_hh_l{l}"] = jax.random.uniform(
            next(ki), (3 * hidden_size, hidden_size), jnp.float32, -k, k)
        params[f"b_ih_l{l}"] = jax.random.uniform(
            next(ki), (3 * hidden_size,), jnp.float32, -k, k)
        params[f"b_hh_l{l}"] = jax.random.uniform(
            next(ki), (3 * hidden_size,), jnp.float32, -k, k)
    params["fc_w"] = jax.random.uniform(next(ki), (vocab_size, hidden_size),
                                        jnp.float32, -k, k)
    params["fc_b"] = jax.random.uniform(next(ki), (vocab_size,),
                                        jnp.float32, -k, k)
    return params


if __name__ == "__main__":
    vocab_size, embed_size, hidden_size, num_layers = 64, 32, 32, 2
    batch, seq = 2, 8

    key = jax.random.PRNGKey(0)
    pkey, tkey, tkey2 = jax.random.split(key, 3)
    params = init_params(pkey, vocab_size, embed_size, hidden_size, num_layers)
    tokens = jax.random.randint(tkey, (batch, seq), 0, vocab_size, dtype=jnp.int32)
    ref = reference_forward(tokens, params, num_layers)

    # --- f32 path: tight tolerance vs reference ------------------------------
    padded_f32 = prepare_padded_params(params, vocab_size=vocab_size,
                                       embed_size=embed_size,
                                       hidden_size=hidden_size,
                                       num_layers=num_layers,
                                       param_dtype=jnp.float32)
    out_f32 = jax.block_until_ready(
        next_word_gru_forward(tokens, padded_f32, num_layers=num_layers,
                              vocab_size=vocab_size))
    assert out_f32.shape == (batch, vocab_size)
    assert jnp.allclose(out_f32, ref, atol=1e-4, rtol=1e-4), \
        "Pallas f32 output mismatch vs reference"

    # --- f32 path, larger batch + forced small seq-chunk: exercises the pipelined
    #     seq grid (multi-chunk h carry + tail masking) and the batch-parallel axis.
    tokens_b = jax.random.randint(tkey2, (16, seq), 0, vocab_size, dtype=jnp.int32)
    ref_b = reference_forward(tokens_b, params, num_layers)
    out_b = jax.block_until_ready(
        next_word_gru_forward(tokens_b, padded_f32, num_layers=num_layers,
                              vocab_size=vocab_size, max_chunk=3))
    assert out_b.shape == (16, vocab_size)
    assert jnp.allclose(out_b, ref_b, atol=1e-4, rtol=1e-4), \
        "Pallas chunked-recurrence output mismatch vs reference"

    # --- bf16 weights/activations (f32 accumulation): loose tolerance --------
    padded_bf16 = prepare_padded_params(params, vocab_size=vocab_size,
                                        embed_size=embed_size,
                                        hidden_size=hidden_size,
                                        num_layers=num_layers,
                                        param_dtype=jnp.bfloat16)
    out_bf16 = jax.block_until_ready(
        next_word_gru_forward(tokens, padded_bf16, num_layers=num_layers,
                              vocab_size=vocab_size))
    assert out_bf16.shape == (batch, vocab_size)
    assert bool(jnp.all(jnp.isfinite(out_bf16)))
    assert float(jnp.max(jnp.abs(out_bf16 - ref))) < 0.25, \
        "Pallas bf16 output drifted too far from reference"

    print("KERNEL_OK")
</pallas_src>

<mosaic_0001>
module attributes {stable_mosaic.version = 11 : i64} {
  func.func @_matmul_bias_kernel(%arg0: i32, %arg1: i32, %arg2: memref<64x128xf32, #tpu.memory_space<vmem>>, %arg3: memref<128x768xf32, #tpu.memory_space<vmem>>, %arg4: memref<1x768xf32, #tpu.memory_space<vmem>>, %arg5: memref<64x768xf32, #tpu.memory_space<vmem>>) attributes {dimension_semantics = [#tpu.dimension_semantics<parallel>, #tpu.dimension_semantics<parallel>], iteration_bounds = array<i64: 1, 1>, scalar_prefetch = 0 : i64, scratch_operands = 0 : i64, tpu.core_type = #tpu.core_type<tc>, window_params = [{transform_indices = @transform_0, window_bounds = array<i64: 64, 128>}, {transform_indices = @transform_1, window_bounds = array<i64: 128, 768>}, {transform_indices = @transform_2, window_bounds = array<i64: 1, 768>}, {transform_indices = @transform_3, window_bounds = array<i64: 64, 768>}]} {
    %c0 = arith.constant 0 : index
    %c0_0 = arith.constant 0 : index
    %0 = vector.load %arg2[%c0, %c0_0] : memref<64x128xf32, #tpu.memory_space<vmem>>, vector<64x128xf32>
    %c0_1 = arith.constant 0 : index
    %c0_2 = arith.constant 0 : index
    %1 = vector.load %arg3[%c0_1, %c0_2] : memref<128x768xf32, #tpu.memory_space<vmem>>, vector<128x768xf32>
    %cst = arith.constant dense<0.000000e+00> : vector<64x768xf32>
    %2 = tpu.matmul %0, %1, %cst {dimension_numbers = #tpu.dot_dimension_numbers<[1], [0], [0], [1], [0, 0, 1, 1], [], []>} : vector<64x128xf32>, vector<128x768xf32>, vector<64x768xf32> -> vector<64x768xf32>
    %c0_3 = arith.constant 0 : index
    %c0_4 = arith.constant 0 : index
    %3 = vector.load %arg4[%c0_3, %c0_4] : memref<1x768xf32, #tpu.memory_space<vmem>>, vector<1x768xf32>
    %4 = vector.broadcast %3 : vector<1x768xf32> to vector<64x768xf32>
    %5 = arith.addf %2, %4 : vector<64x768xf32>
    %c0_5 = arith.constant 0 : index
    %c0_6 = arith.constant 0 : index
    %6 = vector.load %arg5[%c0_5, %c0_6] : memref<64x768xf32, #tpu.memory_space<vmem>>, vector<64x768xf32>
    tpu.vector_store %arg5[%c0_5, %c0_6], %5 {strides = array<i32>} : memref<64x768xf32, #tpu.memory_space<vmem>>, vector<64x768xf32>,
    return
  }
  func.func @transform_0(%arg0: i32, %arg1: i32) -> (i32, i32) {
    %c0_i32 = arith.constant 0 : i32
    %c0_i32_0 = arith.constant 0 : i32
    return %arg0, %c0_i32 : i32, i32
  }
  func.func @transform_1(%arg0: i32, %arg1: i32) -> (i32, i32) {
    %c0_i32 = arith.constant 0 : i32
    %c0_i32_0 = arith.constant 0 : i32
    return %c0_i32, %arg1 : i32, i32
  }
  func.func @transform_2(%arg0: i32, %arg1: i32) -> (i32, i32) {
    %c0_i32 = arith.constant 0 : i32
    %c0_i32_0 = arith.constant 0 : i32
    return %c0_i32, %arg1 : i32, i32
  }
  func.func @transform_3(%arg0: i32, %arg1: i32) -> (i32, i32) {
    %c0_i32 = arith.constant 0 : i32
    return %arg0, %arg1 : i32, i32
  }
}

</mosaic_0001>

<llo_original>
// kernel: tpu_custom_call.1
$region0: #{tpu_custom_call.1}
  #allocation0 [shape = 'u32[]', space=smem, size = 0x4, offset = 0x4, fixed_abs, tag = 'smem constant byte address 0x4 - core index']
  #allocation1 [shape = 'u32[72,128]{1,0:T(1,128)}', space=vmem, size = 0x9000, scoped, tag = 'internal scratch']
  %s0 = inlined_call_operand.hbm [shape: f32[64,128], index: 0, kind: input, shape index: {}]
  %s1 = inlined_call_operand.hbm [shape: f32[128,768], index: 1, kind: input, shape index: {}]
  %s2 = inlined_call_operand.hbm [shape: f32[1,768], index: 2, kind: input, shape index: {}]
  %s3 = inlined_call_operand.hbm [shape: f32[64,768], index: 3, kind: output, shape index: {}]
  %s4 = sld [smem:[#allocation0]]
  $region34: #{tpu_custom_call.1} parent=0
    _
  %s6 = ssub.s32 1, %s4
  %s7 = scalar_select 0, %s6, %s4
  $region1: #{tpu_custom_call.1} parent=0
    #allocation2 [shape = 'u8[32768]{0}', space=vmem, size = 0x8000, scoped, tag = 'input window, operand 0, single buffered']
    #allocation3 [shape = 's32[1]{0}', space=sflag, size = 0x4, scoped, tag = 'scoped memory for tpu_custom_call.1']
    #allocation4 [shape = 's32[1]{0}', space=sflag, size = 0x4, scoped, tag = 'scoped memory for tpu_custom_call.1']
    #allocation5 [shape = 'u8[393216]{0}', space=vmem, size = 0x60000, scoped, tag = 'input window, operand 1, single buffered']
    #allocation6 [shape = 's32[1]{0}', space=sflag, size = 0x4, scoped, tag = 'scoped memory for tpu_custom_call.1']
    #allocation7 [shape = 'u8[3072]{0}', space=vmem, size = 0xc00, scoped, tag = 'input window, operand 2, single buffered']
    #allocation8 [shape = 'u8[196608]{0}', space=vmem, size = 0x30000, scoped, tag = 'output window, operand 0, single buffered']
    %8 = vsyncpa [#allocation3], 0
    %9 = vsyncpa [#allocation6], 0
    %10 = vsyncpa [#allocation4], 0
    // Predicated region
    $region2: #{tpu_custom_call.1} parent=1 // pred_check
      _
    $region3: #{tpu_custom_call.1} parent=1 // pred_check_branch
      %12 = sbr.rel (0) target = $region5
    $region4: #{tpu_custom_call.1} parent=1 // pred_region
      %14 = vsyncadd [#allocation3], 0
      %s15 = sshll.u32 %s0, 4
      %s16 = int_to_ptr.hbm [resolvable:$true] %s15
      %s17 = sshll.u32 [#allocation2], 4
      %s18 = int_to_ptr.vmem [resolvable:$true] %s17
      %23 = dma.hbm_to_vmem [thread:$0]  %s16, 1024, %s18, [#allocation3], 128, 128, 8
    $region5: #{tpu_custom_call.1} parent=1 // pred_fallthru
      _
    // Predicated region
    $region6: #{tpu_custom_call.1} parent=1 // pred_check
      _
    $region7: #{tpu_custom_call.1} parent=1 // pred_check_branch
      %25 = sbr.rel (0) target = $region9
    $region8: #{tpu_custom_call.1} parent=1 // pred_region
      %27 = vsyncadd [#allocation6], 0
      %s28 = sshll.u32 %s1, 4
      %s29 = int_to_ptr.hbm [resolvable:$true] %s28
      %s30 = sshll.u32 [#allocation5], 4
      %s31 = int_to_ptr.vmem [resolvable:$true] %s30
      %36 = dma.hbm_to_vmem [thread:$0]  %s29, 12288, %s31, [#allocation6], 768, 768, 48
    $region9: #{tpu_custom_call.1} parent=1 // pred_fallthru
      _
    // Predicated region
    $region10: #{tpu_custom_call.1} parent=1 // pred_check
      _
    $region11: #{tpu_custom_call.1} parent=1 // pred_check_branch
      %38 = sbr.rel (0) target = $region13
    $region12: #{tpu_custom_call.1} parent=1 // pred_region
      %40 = vsyncadd [#allocation6], 0
      %s42 = sshll.u32 %s2, 4
      %s43 = int_to_ptr.hbm [resolvable:$true] %s42
      %s44 = sshll.u32 [#allocation7], 4
      %s45 = int_to_ptr.vmem [resolvable:$true] %s44
      %47 = dma.hbm_to_vmem [thread:$0]  %s43, 96, %s45, [#allocation6]
    $region13: #{tpu_custom_call.1} parent=1 // pred_fallthru
      _
    // Predicated region
    $region14: #{tpu_custom_call.1} parent=1 // pred_check
      _
    $region15: #{tpu_custom_call.1} parent=1 // pred_check_branch
      %49 = sbr.rel (0) target = $region17
    $region16: #{tpu_custom_call.1} parent=1 // pred_region
      %51 = dma.done [#allocation3], 1024
    $region17: #{tpu_custom_call.1} parent=1 // pred_fallthru
      _
    // Predicated region
    $region18: #{tpu_custom_call.1} parent=1 // pred_check
      _
    $region19: #{tpu_custom_call.1} parent=1 // pred_check_branch
      %53 = sbr.rel (0) target = $region21
    $region20: #{tpu_custom_call.1} parent=1 // pred_region
      %55 = dma.done [#allocation6], 12288
    $region21: #{tpu_custom_call.1} parent=1 // pred_fallthru
      _
    // Predicated region
    $region22: #{tpu_custom_call.1} parent=1 // pred_check
      _
    $region23: #{tpu_custom_call.1} parent=1 // pred_check_branch
      %57 = sbr.rel (0) target = $region25
    $region24: #{tpu_custom_call.1} parent=1 // pred_region
      %59 = dma.done [#allocation6], 96
    $region25: #{tpu_custom_call.1} parent=1 // pred_fallthru
      _
    %v60 = vld [vmem:[#allocation2] sm:$0xff]
    %v61 = vld [vmem:[#allocation2 + $0x8] sm:$0xff]
    %v62 = vld [vmem:[#allocation2 + $0x10] sm:$0xff]
    %v63 = vld [vmem:[#allocation2 + $0x18] sm:$0xff]
    %v64 = vld [vmem:[#allocation2 + $0x20] sm:$0xff]
    %v65 = vld [vmem:[#allocation2 + $0x28] sm:$0xff]
    %v66 = vld [vmem:[#allocation2 + $0x30] sm:$0xff]
    %v67 = vld [vmem:[#allocation2 + $0x38] sm:$0xff]
    %v68 = vld [vmem:[#allocation5] sm:$0xff]
    %v69 = vld [vmem:[#allocation5 + $0x8] sm:$0xff]
    %v70 = vld [vmem:[#allocation5 + $0x10] sm:$0xff]
    %v71 = vld [vmem:[#allocation5 + $0x18] sm:$0xff]
    %v72 = vld [vmem:[#allocation5 + $0x20] sm:$0xff]
    %v73 = vld [vmem:[#allocation5 + $0x28] sm:$0xff]
    %v74 = vld [vmem:[#allocation5 + $0x30] sm:$0xff]
    %v75 = vld [vmem:[#allocation5 + $0x38] sm:$0xff]
    %v76 = vld [vmem:[#allocation5 + $0x40] sm:$0xff]
    %v77 = vld [vmem:[#allocation5 + $0x48] sm:$0xff]
    %v78 = vld [vmem:[#allocation5 + $0x50] sm:$0xff]
    %v79 = vld [vmem:[#allocation5 + $0x58] sm:$0xff]
    %v80 = vld [vmem:[#allocation5 + $0x60] sm:$0xff]
    %v81 = vld [vmem:[#allocation5 + $0x68] sm:$0xff]
    %v82 = vld [vmem:[#allocation5 + $0x70] sm:$0xff]
    %v83 = vld [vmem:[#allocation5 + $0x78] sm:$0xff]
    %v84 = vld [vmem:[#allocation5 + $0x80] sm:$0xff]
    %v85 = vld [vmem:[#allocation5 + $0x88] sm:$0xff]
    %v86 = vld [vmem:[#allocation5 + $0x90] sm:$0xff]
    %v87 = vld [vmem:[#allocation5 + $0x98] sm:$0xff]
    %v88 = vld [vmem:[#allocation5 + $0xa0] sm:$0xff]
    %v89 = vld [vmem:[#allocation5 + $0xa8] sm:$0xff]
    %v90 = vld [vmem:[#allocation5 + $0xb0] sm:$0xff]
    %v91 = vld [vmem:[#allocation5 + $0xb8] sm:$0xff]
    %v92 = vld [vmem:[#allocation5 + $0xc0] sm:$0xff]
    %v93 = vld [vmem:[#allocation5 + $0xc8] sm:$0xff]
    %v94 = vld [vmem:[#allocation5 + $0xd0] sm:$0xff]
    %v95 = vld [vmem:[#allocation5 + $0xd8] sm:$0xff]
    %v96 = vld [vmem:[#allocation5 + $0xe0] sm:$0xff]
    %v97 = vld [vmem:[#allocation5 + $0xe8] sm:$0xff]
    %v98 = vld [vmem:[#allocation5 + $0xf0] sm:$0xff]
    %v99 = vld [vmem:[#allocation5 + $0xf8] sm:$0xff]
    %v100 = vld [vmem:[#allocation5 + $0x100] sm:$0xff]
    %v101 = vld [vmem:[#allocation5 + $0x108] sm:$0xff]
    %v102 = vld [vmem:[#allocation5 + $0x110] sm:$0xff]
    %v103 = vld [vmem:[#allocation5 + $0x118] sm:$0xff]
    %v104 = vld [vmem:[#allocation5 + $0x120] sm:$0xff]
    %v105 = vld [vmem:[#allocation5 + $0x128] sm:$0xff]
    %v106 = vld [vmem:[#allocation5 + $0x130] sm:$0xff]
    %v107 = vld [vmem:[#allocation5 + $0x138] sm:$0xff]
    %v108 = vld [vmem:[#allocation5 + $0x140] sm:$0xff]
    %v109 = vld [vmem:[#allocation5 + $0x148] sm:$0xff]
    %v110 = vld [vmem:[#allocation5 + $0x150] sm:$0xff]
    %v111 = vld [vmem:[#allocation5 + $0x158] sm:$0xff]
    %v112 = vld [vmem:[#allocation5 + $0x160] sm:$0xff]
    %v113 = vld [vmem:[#allocation5 + $0x168] sm:$0xff]
    %v114 = vld [vmem:[#allocation5 + $0x170] sm:$0xff]
    %v115 = vld [vmem:[#allocation5 + $0x178] sm:$0xff]
    %v116 = vld [vmem:[#allocation5 + $0x180] sm:$0xff]
    %v117 = vld [vmem:[#allocation5 + $0x188] sm:$0xff]
    %v118 = vld [vmem:[#allocation5 + $0x190] sm:$0xff]
    %v119 = vld [vmem:[#allocation5 + $0x198] sm:$0xff]
    %v120 = vld [vmem:[#allocation5 + $0x1a0] sm:$0xff]
    %v121 = vld [vmem:[#allocation5 + $0x1a8] sm:$0xff]
    %v122 = vld [vmem:[#allocation5 + $0x1b0] sm:$0xff]
    %v123 = vld [vmem:[#allocation5 + $0x1b8] sm:$0xff]
    %v124 = vld [vmem:[#allocation5 + $0x1c0] sm:$0xff]
    %v125 = vld [vmem:[#allocation5 + $0x1c8] sm:$0xff]
    %v126 = vld [vmem:[#allocation5 + $0x1d0] sm:$0xff]
    %v127 = vld [vmem:[#allocation5 + $0x1d8] sm:$0xff]
    %v128 = vld [vmem:[#allocation5 + $0x1e0] sm:$0xff]
    %v129 = vld [vmem:[#allocation5 + $0x1e8] sm:$0xff]
    %v130 = vld [vmem:[#allocation5 + $0x1f0] sm:$0xff]
    %v131 = vld [vmem:[#allocation5 + $0x1f8] sm:$0xff]
    %v132 = vld [vmem:[#allocation5 + $0x200] sm:$0xff]
    %v133 = vld [vmem:[#allocation5 + $0x208] sm:$0xff]
    %v134 = vld [vmem:[#allocation5 + $0x210] sm:$0xff]
    %v135 = vld [vmem:[#allocation5 + $0x218] sm:$0xff]
    %v136 = vld [vmem:[#allocation5 + $0x220] sm:$0xff]
    %v137 = vld [vmem:[#allocation5 + $0x228] sm:$0xff]
    %v138 = vld [vmem:[#allocation5 + $0x230] sm:$0xff]
    %v139 = vld [vmem:[#allocation5 + $0x238] sm:$0xff]
    %v140 = vld [vmem:[#allocation5 + $0x240] sm:$0xff]
    %v141 = vld [vmem:[#allocation5 + $0x248] sm:$0xff]
    %v142 = vld [vmem:[#allocation5 + $0x250] sm:$0xff]
    %v143 = vld [vmem:[#allocation5 + $0x258] sm:$0xff]
    %v144 = vld [vmem:[#allocation5 + $0x260] sm:$0xff]
    %v145 = vld [vmem:[#allocation5 + $0x268] sm:$0xff]
    %v146 = vld [vmem:[#allocation5 + $0x270] sm:$0xff]
    %v147 = vld [vmem:[#allocation5 + $0x278] sm:$0xff]
    %v148 = vld [vmem:[#allocation5 + $0x280] sm:$0xff]
    %v149 = vld [vmem:[#allocation5 + $0x288] sm:$0xff]
    %v150 = vld [vmem:[#allocation5 + $0x290] sm:$0xff]
    %v151 = vld [vmem:[#allocation5 + $0x298] sm:$0xff]
    %v152 = vld [vmem:[#allocation5 + $0x2a0] sm:$0xff]
    %v153 = vld [vmem:[#allocation5 + $0x2a8] sm:$0xff]
    %v154 = vld [vmem:[#allocation5 + $0x2b0] sm:$0xff]
    %v155 = vld [vmem:[#allocation5 + $0x2b8] sm:$0xff]
    %v156 = vld [vmem:[#allocation5 + $0x2c0] sm:$0xff]
    %v157 = vld [vmem:[#allocation5 + $0x2c8] sm:$0xff]
    %v158 = vld [vmem:[#allocation5 + $0x2d0] sm:$0xff]
    %v159 = vld [vmem:[#allocation5 + $0x2d8] sm:$0xff]
    %v160 = vld [vmem:[#allocation5 + $0x2e0] sm:$0xff]
    %v161 = vld [vmem:[#allocation5 + $0x2e8] sm:$0xff]
    %v162 = vld [vmem:[#allocation5 + $0x2f0] sm:$0xff]
    %v163 = vld [vmem:[#allocation5 + $0x2f8] sm:$0xff]
    %v164 = vld [vmem:[#allocation7] sm:$0x3f]
    %v166 = vperm.slane %v164, 0
    %v167 = vperm.slane %v164, 1
    %v168 = vperm.slane %v164, 2
    %v169 = vperm.slane %v164, 3
    %v170 = vperm.slane %v164, 4
    %v171 = vperm.slane %v164, 5
    %178 = vmatpush.msra.mxu0 %v158
    %179 = vmatpush.msra.mxu0 %v152
    %180 = vmatpush.msra.mxu0 %v146
    %181 = vmatpush.msra.mxu0 %v140
    %182 = vmatpush.msra.mxu0 %v134
    %183 = vmatpush.msra.mxu0 %v128
    %184 = vmatpush.msra.mxu0 %v122
    %185 = vmatpush.msra.mxu0 %v116
    %186 = vmatpush.msra.mxu0 %v110
    %187 = vmatpush.msra.mxu0 %v104
    %188 = vmatpush.msra.mxu0 %v98
    %189 = vmatpush.msra.mxu0 %v92
    %190 = vmatpush.msra.mxu0 %v86
    %191 = vmatpush.msra.mxu0 %v80
    %192 = vmatpush.msra.mxu0 %v74
    %193 = vmatpush.msra.mxu0 %v68
    %194 = vmatmul.f32.gmra.mxu0 %v60
    %v195 = vpop.f32.mrf.mxu0
    %v196 = vadd.f32 %v166, %v195
    %197 = vmatmul.f32.gmra.mxu0 %v61
    %v198 = vpop.f32.mrf.mxu0
    %v199 = vadd.f32 %v166, %v198
    %200 = vmatmul.f32.gmra.mxu0 %v62
    %v201 = vpop.f32.mrf.mxu0
    %v202 = vadd.f32 %v166, %v201
    %203 = vmatmul.f32.gmra.mxu0 %v63
    %v204 = vpop.f32.mrf.mxu0
    %v205 = vadd.f32 %v166, %v204
    %206 = vmatmul.f32.gmra.mxu0 %v64
    %v207 = vpop.f32.mrf.mxu0
    %v208 = vadd.f32 %v166, %v207
    %209 = vmatmul.f32.gmra.mxu0 %v65
    %v210 = vpop.f32.mrf.mxu0
    %v211 = vadd.f32 %v166, %v210
    %212 = vmatmul.f32.gmra.mxu0 %v66
    %v213 = vpop.f32.mrf.mxu0
    %v214 = vadd.f32 %v166, %v213
    %215 = vmatmul.f32.gmra.mxu0 %v67
    %v216 = vpop.f32.mrf.mxu0
    %v217 = vadd.f32 %v166, %v216
    %218 = vdwg.mxu0
    %219 = vmatpush.msra.mxu0 %v159
    %220 = vmatpush.msra.mxu0 %v153
    %221 = vmatpush.msra.mxu0 %v147
    %222 = vmatpush.msra.mxu0 %v141
    %223 = vmatpush.msra.mxu0 %v135
    %224 = vmatpush.msra.mxu0 %v129
    %225 = vmatpush.msra.mxu0 %v123
    %226 = vmatpush.msra.mxu0 %v117
    %227 = vmatpush.msra.mxu0 %v111
    %228 = vmatpush.msra.mxu0 %v105
    %229 = vmatpush.msra.mxu0 %v99
    %230 = vmatpush.msra.mxu0 %v93
    %231 = vmatpush.msra.mxu0 %v87
    %232 = vmatpush.msra.mxu0 %v81
    %233 = vmatpush.msra.mxu0 %v75
    %234 = vmatpush.msra.mxu0 %v69
    %235 = vmatmul.f32.gmra.mxu0 %v60
    %v236 = vpop.f32.mrf.mxu0
    %v237 = vadd.f32 %v167, %v236
    %238 = vmatmul.f32.gmra.mxu0 %v61
    %v239 = vpop.f32.mrf.mxu0
    %v240 = vadd.f32 %v167, %v239
    %241 = vmatmul.f32.gmra.mxu0 %v62
    %v242 = vpop.f32.mrf.mxu0
    %v243 = vadd.f32 %v167, %v242
    %244 = vmatmul.f32.gmra.mxu0 %v63
    %v245 = vpop.f32.mrf.mxu0
    %v246 = vadd.f32 %v167, %v245
    %247 = vmatmul.f32.gmra.mxu0 %v64
    %v248 = vpop.f32.mrf.mxu0
    %v249 = vadd.f32 %v167, %v248
    %250 = vmatmul.f32.gmra.mxu0 %v65
    %v251 = vpop.f32.mrf.mxu0
    %v252 = vadd.f32 %v167, %v251
    %253 = vmatmul.f32.gmra.mxu0 %v66
    %v254 = vpop.f32.mrf.mxu0
    %v255 = vadd.f32 %v167, %v254
    %256 = vmatmul.f32.gmra.mxu0 %v67
    %v257 = vpop.f32.mrf.mxu0
    %v258 = vadd.f32 %v167, %v257
    %259 = vdwg.mxu0
    %260 = vmatpush.msra.mxu0 %v160
    %261 = vmatpush.msra.mxu0 %v154
    %262 = vmatpush.msra.mxu0 %v148
    %263 = vmatpush.msra.mxu0 %v142
    %264 = vmatpush.msra.mxu0 %v136
    %265 = vmatpush.msra.mxu0 %v130
    %266 = vmatpush.msra.mxu0 %v124
    %267 = vmatpush.msra.mxu0 %v118
    %268 = vmatpush.msra.mxu0 %v112
    %269 = vmatpush.msra.mxu0 %v106
    %270 = vmatpush.msra.mxu0 %v100
    %271 = vmatpush.msra.mxu0 %v94
    %272 = vmatpush.msra.mxu0 %v88
    %273 = vmatpush.msra.mxu0 %v82
    %274 = vmatpush.msra.mxu0 %v76
    %275 = vmatpush.msra.mxu0 %v70
    %276 = vmatmul.f32.gmra.mxu0 %v60
    %v277 = vpop.f32.mrf.mxu0
    %v278 = vadd.f32 %v168, %v277
    %279 = vmatmul.f32.gmra.mxu0 %v61
    %v280 = vpop.f32.mrf.mxu0
    %v281 = vadd.f32 %v168, %v280
    %282 = vmatmul.f32.gmra.mxu0 %v62
    %v283 = vpop.f32.mrf.mxu0
    %v284 = vadd.f32 %v168, %v283
    %285 = vmatmul.f32.gmra.mxu0 %v63
    %v286 = vpop.f32.mrf.mxu0
    %v287 = vadd.f32 %v168, %v286
    %288 = vmatmul.f32.gmra.mxu0 %v64
    %v289 = vpop.f32.mrf.mxu0
    %v290 = vadd.f32 %v168, %v289
    %291 = vmatmul.f32.gmra.mxu0 %v65
    %v292 = vpop.f32.mrf.mxu0
    %v293 = vadd.f32 %v168, %v292
    %294 = vmatmul.f32.gmra.mxu0 %v66
    %v295 = vpop.f32.mrf.mxu0
    %v296 = vadd.f32 %v168, %v295
    %297 = vmatmul.f32.gmra.mxu0 %v67
    %v298 = vpop.f32.mrf.mxu0
    %v299 = vadd.f32 %v168, %v298
    %300 = vdwg.mxu0
    %301 = vmatpush.msra.mxu0 %v161
    %302 = vmatpush.msra.mxu0 %v155
    %303 = vmatpush.msra.mxu0 %v149
    %304 = vmatpush.msra.mxu0 %v143
    %305 = vmatpush.msra.mxu0 %v137
    %306 = vmatpush.msra.mxu0 %v131
    %307 = vmatpush.msra.mxu0 %v125
    %308 = vmatpush.msra.mxu0 %v119
    %309 = vmatpush.msra.mxu0 %v113
    %310 = vmatpush.msra.mxu0 %v107
    %311 = vmatpush.msra.mxu0 %v101
    %312 = vmatpush.msra.mxu0 %v95
    %313 = vmatpush.msra.mxu0 %v89
    %314 = vmatpush.msra.mxu0 %v83
    %315 = vmatpush.msra.mxu0 %v77
    %316 = vmatpush.msra.mxu0 %v71
    %317 = vmatmul.f32.gmra.mxu0 %v60
    %v318 = vpop.f32.mrf.mxu0
    %v319 = vadd.f32 %v169, %v318
    %320 = vmatmul.f32.gmra.mxu0 %v61
    %v321 = vpop.f32.mrf.mxu0
    %v322 = vadd.f32 %v169, %v321
    %323 = vmatmul.f32.gmra.mxu0 %v62
    %v324 = vpop.f32.mrf.mxu0
    %v325 = vadd.f32 %v169, %v324
    %326 = vmatmul.f32.gmra.mxu0 %v63
    %v327 = vpop.f32.mrf.mxu0
    %v328 = vadd.f32 %v169, %v327
    %329 = vmatmul.f32.gmra.mxu0 %v64
    %v330 = vpop.f32.mrf.mxu0
    %v331 = vadd.f32 %v169, %v330
    %332 = vmatmul.f32.gmra.mxu0 %v65
    %v333 = vpop.f32.mrf.mxu0
    %v334 = vadd.f32 %v169, %v333
    %335 = vmatmul.f32.gmra.mxu0 %v66
    %v336 = vpop.f32.mrf.mxu0
    %v337 = vadd.f32 %v169, %v336
    %338 = vmatmul.f32.gmra.mxu0 %v67
    %v339 = vpop.f32.mrf.mxu0
    %v340 = vadd.f32 %v169, %v339
    %341 = vdwg.mxu0
    %342 = vmatpush.msra.mxu0 %v162
    %343 = vmatpush.msra.mxu0 %v156
    %344 = vmatpush.msra.mxu0 %v150
    %345 = vmatpush.msra.mxu0 %v144
    %346 = vmatpush.msra.mxu0 %v138
    %347 = vmatpush.msra.mxu0 %v132
    %348 = vmatpush.msra.mxu0 %v126
    %349 = vmatpush.msra.mxu0 %v120
    %350 = vmatpush.msra.mxu0 %v114
    %351 = vmatpush.msra.mxu0 %v108
    %352 = vmatpush.msra.mxu0 %v102
    %353 = vmatpush.msra.mxu0 %v96
    %354 = vmatpush.msra.mxu0 %v90
    %355 = vmatpush.msra.mxu0 %v84
    %356 = vmatpush.msra.mxu0 %v78
    %357 = vmatpush.msra.mxu0 %v72
    %358 = vmatmul.f32.gmra.mxu0 %v60
    %v359 = vpop.f32.mrf.mxu0
    %v360 = vadd.f32 %v170, %v359
    %361 = vmatmul.f32.gmra.mxu0 %v61
    %v362 = vpop.f32.mrf.mxu0
    %v363 = vadd.f32 %v170, %v362
    %364 = vmatmul.f32.gmra.mxu0 %v62
    %v365 = vpop.f32.mrf.mxu0
    %v366 = vadd.f32 %v170, %v365
    %367 = vmatmul.f32.gmra.mxu0 %v63
    %v368 = vpop.f32.mrf.mxu0
    %v369 = vadd.f32 %v170, %v368
    %370 = vmatmul.f32.gmra.mxu0 %v64
    %v371 = vpop.f32.mrf.mxu0
    %v372 = vadd.f32 %v170, %v371
    %373 = vmatmul.f32.gmra.mxu0 %v65
    %v374 = vpop.f32.mrf.mxu0
    %v375 = vadd.f32 %v170, %v374
    %376 = vmatmul.f32.gmra.mxu0 %v66
    %v377 = vpop.f32.mrf.mxu0
    %v378 = vadd.f32 %v170, %v377
    %379 = vmatmul.f32.gmra.mxu0 %v67
    %v380 = vpop.f32.mrf.mxu0
    %v381 = vadd.f32 %v170, %v380
    %382 = vdwg.mxu0
    %383 = vmatpush.msra.mxu0 %v163
    %384 = vmatpush.msra.mxu0 %v157
    %385 = vmatpush.msra.mxu0 %v151
    %386 = vmatpush.msra.mxu0 %v145
    %387 = vmatpush.msra.mxu0 %v139
    %388 = vmatpush.msra.mxu0 %v133
    %389 = vmatpush.msra.mxu0 %v127
    %390 = vmatpush.msra.mxu0 %v121
    %391 = vmatpush.msra.mxu0 %v115
    %392 = vmatpush.msra.mxu0 %v109
    %393 = vmatpush.msra.mxu0 %v103
    %394 = vmatpush.msra.mxu0 %v97
    %395 = vmatpush.msra.mxu0 %v91
    %396 = vmatpush.msra.mxu0 %v85
    %397 = vmatpush.msra.mxu0 %v79
    %398 = vmatpush.msra.mxu0 %v73
    %399 = vmatmul.f32.gmra.mxu0 %v60
    %v400 = vpop.f32.mrf.mxu0
    %v401 = vadd.f32 %v171, %v400
    %402 = vmatmul.f32.gmra.mxu0 %v61
    %v403 = vpop.f32.mrf.mxu0
    %v404 = vadd.f32 %v171, %v403
    %405 = vmatmul.f32.gmra.mxu0 %v62
    %v406 = vpop.f32.mrf.mxu0
    %v407 = vadd.f32 %v171, %v406
    %408 = vmatmul.f32.gmra.mxu0 %v63
    %v409 = vpop.f32.mrf.mxu0
    %v410 = vadd.f32 %v171, %v409
    %411 = vmatmul.f32.gmra.mxu0 %v64
    %v412 = vpop.f32.mrf.mxu0
    %v413 = vadd.f32 %v171, %v412
    %414 = vmatmul.f32.gmra.mxu0 %v65
    %v415 = vpop.f32.mrf.mxu0
    %v416 = vadd.f32 %v171, %v415
    %417 = vmatmul.f32.gmra.mxu0 %v66
    %v418 = vpop.f32.mrf.mxu0
    %v419 = vadd.f32 %v171, %v418
    %420 = vmatmul.f32.gmra.mxu0 %v67
    %v421 = vpop.f32.mrf.mxu0
    %v422 = vadd.f32 %v171, %v421
    %423 = vdwg.mxu0
    %424 = vst [vmem:[#allocation8] sm:$0xff] %v196
    %425 = vst [vmem:[#allocation8 + $0x8] sm:$0xff] %v237
    %426 = vst [vmem:[#allocation8 + $0x10] sm:$0xff] %v278
    %427 = vst [vmem:[#allocation8 + $0x18] sm:$0xff] %v319
    %428 = vst [vmem:[#allocation8 + $0x20] sm:$0xff] %v360
    %429 = vst [vmem:[#allocation8 + $0x28] sm:$0xff] %v401
    %430 = vst [vmem:[#allocation8 + $0x30] sm:$0xff] %v199
    %431 = vst [vmem:[#allocation8 + $0x38] sm:$0xff] %v240
    %432 = vst [vmem:[#allocation8 + $0x40] sm:$0xff] %v281
    %433 = vst [vmem:[#allocation8 + $0x48] sm:$0xff] %v322
    %434 = vst [vmem:[#allocation8 + $0x50] sm:$0xff] %v363
    %435 = vst [vmem:[#allocation8 + $0x58] sm:$0xff] %v404
    %436 = vst [vmem:[#allocation8 + $0x60] sm:$0xff] %v202
    %437 = vst [vmem:[#allocation8 + $0x68] sm:$0xff] %v243
    %438 = vst [vmem:[#allocation8 + $0x70] sm:$0xff] %v284
    %439 = vst [vmem:[#allocation8 + $0x78] sm:$0xff] %v325
    %440 = vst [vmem:[#allocation8 + $0x80] sm:$0xff] %v366
    %441 = vst [vmem:[#allocation8 + $0x88] sm:$0xff] %v407
    %442 = vst [vmem:[#allocation8 + $0x90] sm:$0xff] %v205
    %443 = vst [vmem:[#allocation8 + $0x98] sm:$0xff] %v246
    %444 = vst [vmem:[#allocation8 + $0xa0] sm:$0xff] %v287
    %445 = vst [vmem:[#allocation8 + $0xa8] sm:$0xff] %v328
    %446 = vst [vmem:[#allocation8 + $0xb0] sm:$0xff] %v369
    %447 = vst [vmem:[#allocation8 + $0xb8] sm:$0xff] %v410
    %448 = vst [vmem:[#allocation8 + $0xc0] sm:$0xff] %v208
    %449 = vst [vmem:[#allocation8 + $0xc8] sm:$0xff] %v249
    %450 = vst [vmem:[#allocation8 + $0xd0] sm:$0xff] %v290
    %451 = vst [vmem:[#allocation8 + $0xd8] sm:$0xff] %v331
    %452 = vst [vmem:[#allocation8 + $0xe0] sm:$0xff] %v372
    %453 = vst [vmem:[#allocation8 + $0xe8] sm:$0xff] %v413
    %454 = vst [vmem:[#allocation8 + $0xf0] sm:$0xff] %v211
    %455 = vst [vmem:[#allocation8 + $0xf8] sm:$0xff] %v252
    %456 = vst [vmem:[#allocation8 + $0x100] sm:$0xff] %v293
    %457 = vst [vmem:[#allocation8 + $0x108] sm:$0xff] %v334
    %458 = vst [vmem:[#allocation8 + $0x110] sm:$0xff] %v375
    %459 = vst [vmem:[#allocation8 + $0x118] sm:$0xff] %v416
    %460 = vst [vmem:[#allocation8 + $0x120] sm:$0xff] %v214
    %461 = vst [vmem:[#allocation8 + $0x128] sm:$0xff] %v255
    %462 = vst [vmem:[#allocation8 + $0x130] sm:$0xff] %v296
    %463 = vst [vmem:[#allocation8 + $0x138] sm:$0xff] %v337
    %464 = vst [vmem:[#allocation8 + $0x140] sm:$0xff] %v378
    %465 = vst [vmem:[#allocation8 + $0x148] sm:$0xff] %v419
    %466 = vst [vmem:[#allocation8 + $0x150] sm:$0xff] %v217
    %467 = vst [vmem:[#allocation8 + $0x158] sm:$0xff] %v258
    %468 = vst [vmem:[#allocation8 + $0x160] sm:$0xff] %v299
    %469 = vst [vmem:[#allocation8 + $0x168] sm:$0xff] %v340
    %470 = vst [vmem:[#allocation8 + $0x170] sm:$0xff] %v381
    %471 = vst [vmem:[#allocation8 + $0x178] sm:$0xff] %v422
    // Predicated region
    $region26: #{tpu_custom_call.1} parent=1 // pred_check
      _
    $region27: #{tpu_custom_call.1} parent=1 // pred_check_branch
      %473 = sbr.rel (0) target = $region29
    $region28: #{tpu_custom_call.1} parent=1 // pred_region
      %475 = vsyncadd [#allocation4], 0
      %s476 = sshll.u32 [#allocation8], 4
      %s477 = int_to_ptr.vmem [resolvable:$true] %s476
      %s478 = sshll.u32 %s3, 4
      %s479 = int_to_ptr.hbm [resolvable:$true] %s478
      %484 = dma.vmem_to_hbm [thread:$0]  %s477, 6144, %s479, [#allocation4], 768, 768, 48
    $region29: #{tpu_custom_call.1} parent=1 // pred_fallthru
      _
    // Predicated region
    $region30: #{tpu_custom_call.1} parent=1 // pred_check
      _
    $region31: #{tpu_custom_call.1} parent=1 // pred_check_branch
      %486 = sbr.rel (0) target = $region33
    $region32: #{tpu_custom_call.1} parent=1 // pred_region
      %488 = dma.done [#allocation4], 6144
    $region33: #{tpu_custom_call.1} parent=1 // pred_fallthru
      _
    %489 = vsyncpa [#allocation3], 1
    %490 = vsyncpa [#allocation6], 1
    %491 = vsyncpa [#allocation4], 1

</llo_original>
